<compile_context>
chip_gen: v7x
topology: tpu7x:2x2x1
jax: 0.10.0
libtpu: 0.0.40
codegen_flags: <defaults>
</compile_context>

<pallas_src>
import functools

import jax
import jax.numpy as jnp
from jax.experimental import pallas as pl
from jax.experimental.pallas import tpu as pltpu


def _latent_dist_kernel(x_ref, w_ref, b_ref, mu_ref, sigma_ref, *,
                        n_out, matmul_dtype):
    """Fused head: y = x @ [W_mu.T | W_lv.T] + [b_mu | b_lv];
    mu = y[:, :N], sigma = exp(y[:, N:] / 2)."""
    x = x_ref[...]                                   # (tb, K)
    w = w_ref[...]                                   # (K, 2N), VMEM-resident
    if matmul_dtype is not None:
        # Cast per-tile inside the kernel: feeds the MXU its native dtype with
        # zero extra HBM traffic (no wrapper-side astype pass over x).
        x = x.astype(matmul_dtype)
        w = w.astype(matmul_dtype)
    y = jnp.dot(x, w, preferred_element_type=jnp.float32)   # single MXU push
    y = y + b_ref[...]                               # (1, 2N) broadcast, f32
    # Static slices: exp only touches the sigma half (EUP slot); the mu half
    # is a plain store. For N a multiple of 128 these slices sit on lane-tile
    # boundaries (free); for small N they are a cheap lane select.
    mu_ref[...] = y[:, :n_out].astype(mu_ref.dtype)
    sigma_ref[...] = jnp.exp(y[:, n_out:] * 0.5).astype(sigma_ref.dtype)


def pack_params(w_mu, b_mu, w_lv, b_lv, *, weight_dtype=None):
    """One-time packing (hoisted out of the forward hot path).

    torch Linear weights are (out, in); pack as (K, 2N) = [W_mu.T | W_lv.T]
    and biases as a (1, 2N) f32 row so the kernel does one row-major matmul.
    Optionally store the packed weights in a lower precision (e.g. bf16).
    """
    w_packed = jnp.concatenate([w_mu.T, w_lv.T], axis=1)      # (K, 2N)
    if weight_dtype is not None:
        w_packed = w_packed.astype(weight_dtype)
    b_packed = jnp.concatenate([b_mu, b_lv]).astype(jnp.float32)[None, :]
    return w_packed, b_packed


def _choose_batch_tile(B, K, itemsize, target_bytes=2 << 20):
    """Size the batch tile from K so one x tile is ~target_bytes, clamped to
    [256, B] and rounded down to a multiple of 8 sublanes."""
    tb = max(target_bytes // max(K * itemsize, 1), 256)
    tb = max((tb // 8) * 8, 8)
    if B > 1024:
        # Keep >= 2 grid steps so the "parallel" batch axis can feed both
        # TensorCores on v7x (v5e/v6e have 1 TC; harmless there).
        half = max((((B + 1) // 2) // 8) * 8, 8)
        tb = min(tb, half)
    return B if tb >= B else tb


def _vmem_limit_bytes(tb, K, N, x_itemsize, w_itemsize, out_itemsize,
                      single_buffer_weights):
    """Scoped-VMEM request sized from the actual buffer footprint."""
    twoN = 2 * N
    x_bufs = 2 * tb * K * x_itemsize                         # double-buffered x
    n_wb = 1 if single_buffer_weights else 2
    wb_bufs = n_wb * (K * twoN * w_itemsize + twoN * 4)      # packed W + b
    out_bufs = 2 * 2 * tb * N * out_itemsize                 # 2 outputs, 2 bufs
    need = x_bufs + wb_bufs + out_bufs
    # Generous headroom, but capped at 48 MiB so it also fits v7x's 64 MiB
    # physical VMEM (and is a no-op raise above v5e's 16 MiB default).
    return int(min(max(2 * need, 32 << 20), 48 << 20))


def _build_and_call(x, w_packed, b_packed, *, tb, N, out_dtype, matmul_dtype,
                    single_buffer_weights):
    B, K = x.shape
    twoN = 2 * N
    resident = {}
    if single_buffer_weights:
        # Constant index_map -> the block is never refetched after step 0; a
        # second buffer for it is pure VMEM waste (e.g. 16 MiB at K=8K, 2N=1K).
        resident = dict(pipeline_mode=pl.Buffered(1))
    vmem_limit = _vmem_limit_bytes(tb, K, N, x.dtype.itemsize,
                                   w_packed.dtype.itemsize,
                                   jnp.dtype(out_dtype).itemsize,
                                   single_buffer_weights)
    return pl.pallas_call(
        functools.partial(_latent_dist_kernel, n_out=N,
                          matmul_dtype=matmul_dtype),
        out_shape=(jax.ShapeDtypeStruct((B, N), out_dtype),
                   jax.ShapeDtypeStruct((B, N), out_dtype)),
        grid=(pl.cdiv(B, tb),),
        in_specs=[
            pl.BlockSpec((tb, K), lambda i: (i, 0)),              # x: tiled over B
            pl.BlockSpec((K, twoN), lambda i: (0, 0), **resident),  # packed W
            pl.BlockSpec((1, twoN), lambda i: (0, 0), **resident),  # packed b
        ],
        out_specs=(
            pl.BlockSpec((tb, N), lambda i: (i, 0)),              # mu
            pl.BlockSpec((tb, N), lambda i: (i, 0)),              # sigma
        ),
        compiler_params=pltpu.CompilerParams(
            dimension_semantics=("parallel",),                    # 2 TCs on v7x
            vmem_limit_bytes=vmem_limit),
    )(x, w_packed, b_packed)


def latent_distribution_forward(x, w_packed, b_packed, *,
                                matmul_dtype=None, out_dtype=jnp.float32,
                                target_tile_bytes=2 << 20):
    """Returns (mu, sigma), each of shape (B, 1, N), matching torch's
    mu.unsqueeze(1) / sigma.unsqueeze(1).

    Note: on a partial final batch tile (B % tb != 0) the padded rows go
    through the matmul/exp on junk data and are dropped on writeback —
    standard Pallas behavior.
    """
    B, K = x.shape
    twoN = w_packed.shape[1]
    N = twoN // 2
    tb = _choose_batch_tile(B, K, x.dtype.itemsize, target_tile_bytes)

    try:
        mu, sigma = _build_and_call(
            x, w_packed, b_packed, tb=tb, N=N, out_dtype=out_dtype,
            matmul_dtype=matmul_dtype, single_buffer_weights=True)
    except Exception:
        # Pallas version without BlockSpec(pipeline_mode=...) / Buffered(1):
        # fall back to default double-buffering (correct, just wastes one
        # extra VMEM copy of the packed weight).
        mu, sigma = _build_and_call(
            x, w_packed, b_packed, tb=tb, N=N, out_dtype=out_dtype,
            matmul_dtype=matmul_dtype, single_buffer_weights=False)

    # unsqueeze(1) as in the torch module (cheap reshape; the kernel already
    # produced two separate lane-dense (B, N) slabs, so no column slicing).
    return mu[:, None, :], sigma[:, None, :]


def _init_params(key, in_features, out_features):
    """Matches the module's __init__: mu_fc standard uniform Linear init,
    logvar_fc zero-initialized."""
    k_w, k_b = jax.random.split(key)
    bound = 1.0 / (in_features ** 0.5)
    w_mu = jax.random.uniform(k_w, (out_features, in_features),
                              minval=-bound, maxval=bound, dtype=jnp.float32)
    b_mu = jax.random.uniform(k_b, (out_features,),
                              minval=-bound, maxval=bound, dtype=jnp.float32)
    w_lv = jnp.zeros((out_features, in_features), dtype=jnp.float32)
    b_lv = jnp.zeros((out_features,), dtype=jnp.float32)
    return w_mu, b_mu, w_lv, b_lv


if __name__ == "__main__":
    B, in_features, out_features = 8, 32, 16

    key = jax.random.PRNGKey(0)
    k_x, k_p = jax.random.split(key)
    x = jax.random.normal(k_x, (B, in_features), dtype=jnp.float32)
    w_mu, b_mu, w_lv, b_lv = _init_params(k_p, in_features, out_features)

    # Pack once, outside the hot path.
    w_packed, b_packed = pack_params(w_mu, b_mu, w_lv, b_lv)

    mu, sigma = latent_distribution_forward(x, w_packed, b_packed)
    mu, sigma = jax.block_until_ready((mu, sigma))

    # Reference check in plain JAX (f32 path -> tight tolerance).
    mu_ref = (x @ w_mu.T + b_mu)[:, None, :]
    sigma_ref = jnp.exp((x @ w_lv.T + b_lv) * 0.5)[:, None, :]
    assert mu.shape == (B, 1, out_features) and sigma.shape == (B, 1, out_features)
    assert jnp.allclose(mu, mu_ref, atol=1e-5), \
        float(jnp.max(jnp.abs(mu - mu_ref)))
    assert jnp.allclose(sigma, sigma_ref, atol=1e-5), \
        float(jnp.max(jnp.abs(sigma - sigma_ref)))

    # TODO(synk): the Normal/Independent distribution object, rsample(), and
    # kl_loss() (plus the fixed-sigma / same_sigma constructor branches) are
    # distribution-API conveniences, not kernel compute; only the forward
    # parameter computation (the hot path) is implemented in Pallas.
    print("KERNEL_OK")
</pallas_src>

<mosaic_0001>
module attributes {stable_mosaic.version = 11 : i64} {
  func.func @_latent_dist_kernel(%arg0: i32, %arg1: memref<8x32xf32, #tpu.memory_space<vmem>>, %arg2: memref<32x32xf32, #tpu.memory_space<vmem>>, %arg3: memref<1x32xf32, #tpu.memory_space<vmem>>, %arg4: memref<8x16xf32, #tpu.memory_space<vmem>>, %arg5: memref<8x16xf32, #tpu.memory_space<vmem>>) attributes {dimension_semantics = [#tpu.dimension_semantics<parallel>], iteration_bounds = array<i64: 1>, scalar_prefetch = 0 : i64, scratch_operands = 0 : i64, tpu.core_type = #tpu.core_type<tc>, window_params = [{transform_indices = @transform_0, window_bounds = array<i64: 8, 32>}, {pipeline_mode = #tpu.pipeline_mode<synchronous>, transform_indices = @transform_1, window_bounds = array<i64: 32, 32>}, {pipeline_mode = #tpu.pipeline_mode<synchronous>, transform_indices = @transform_2, window_bounds = array<i64: 1, 32>}, {transform_indices = @transform_3, window_bounds = array<i64: 8, 16>}, {transform_indices = @transform_4, window_bounds = array<i64: 8, 16>}]} {
    %c0 = arith.constant 0 : index
    %c0_0 = arith.constant 0 : index
    %0 = vector.load %arg1[%c0, %c0_0] : memref<8x32xf32, #tpu.memory_space<vmem>>, vector<8x32xf32>
    %c0_1 = arith.constant 0 : index
    %c0_2 = arith.constant 0 : index
    %1 = vector.load %arg2[%c0_1, %c0_2] : memref<32x32xf32, #tpu.memory_space<vmem>>, vector<32x32xf32>
    %cst = arith.constant dense<0.000000e+00> : vector<8x32xf32>
    %2 = tpu.matmul %0, %1, %cst {dimension_numbers = #tpu.dot_dimension_numbers<[1], [0], [0], [1], [0, 0, 1, 1], [], []>} : vector<8x32xf32>, vector<32x32xf32>, vector<8x32xf32> -> vector<8x32xf32>
    %c0_3 = arith.constant 0 : index
    %c0_4 = arith.constant 0 : index
    %3 = vector.load %arg3[%c0_3, %c0_4] : memref<1x32xf32, #tpu.memory_space<vmem>>, vector<1x32xf32>
    %4 = vector.broadcast %3 : vector<1x32xf32> to vector<8x32xf32>
    %5 = arith.addf %2, %4 : vector<8x32xf32>
    %6 = vector.extract_strided_slice %5 {offsets = [0, 0], sizes = [8, 16], strides = [1, 1]} : vector<8x32xf32> to vector<8x16xf32>
    %c0_5 = arith.constant 0 : index
    %c0_6 = arith.constant 0 : index
    %7 = vector.load %arg4[%c0_5, %c0_6] : memref<8x16xf32, #tpu.memory_space<vmem>>, vector<8x16xf32>
    tpu.vector_store %arg4[%c0_5, %c0_6], %6 {strides = array<i32>} : memref<8x16xf32, #tpu.memory_space<vmem>>, vector<8x16xf32>,
    %8 = vector.extract_strided_slice %5 {offsets = [0, 16], sizes = [8, 16], strides = [1, 1]} : vector<8x32xf32> to vector<8x16xf32>
    %cst_7 = arith.constant 5.000000e-01 : f32
    %9 = vector.broadcast %cst_7 : f32 to vector<8x16xf32>
    %10 = arith.mulf %8, %9 : vector<8x16xf32>
    %11 = math.exp %10 : vector<8x16xf32>
    %c0_8 = arith.constant 0 : index
    %c0_9 = arith.constant 0 : index
    %12 = vector.load %arg5[%c0_8, %c0_9] : memref<8x16xf32, #tpu.memory_space<vmem>>, vector<8x16xf32>
    tpu.vector_store %arg5[%c0_8, %c0_9], %11 {strides = array<i32>} : memref<8x16xf32, #tpu.memory_space<vmem>>, vector<8x16xf32>,
    return
  }
  func.func @transform_0(%arg0: i32) -> (i32, i32) {
    %c0_i32 = arith.constant 0 : i32
    %c0_i32_0 = arith.constant 0 : i32
    return %arg0, %c0_i32 : i32, i32
  }
  func.func @transform_1(%arg0: i32) -> (i32, i32) {
    %c0_i32 = arith.constant 0 : i32
    %c0_i32_0 = arith.constant 0 : i32
    %c0_i32_1 = arith.constant 0 : i32
    return %c0_i32, %c0_i32_0 : i32, i32
  }
  func.func @transform_2(%arg0: i32) -> (i32, i32) {
    %c0_i32 = arith.constant 0 : i32
    %c0_i32_0 = arith.constant 0 : i32
    %c0_i32_1 = arith.constant 0 : i32
    return %c0_i32, %c0_i32_0 : i32, i32
  }
  func.func @transform_3(%arg0: i32) -> (i32, i32) {
    %c0_i32 = arith.constant 0 : i32
    %c0_i32_0 = arith.constant 0 : i32
    return %arg0, %c0_i32 : i32, i32
  }
  func.func @transform_4(%arg0: i32) -> (i32, i32) {
    %c0_i32 = arith.constant 0 : i32
    %c0_i32_0 = arith.constant 0 : i32
    return %arg0, %c0_i32 : i32, i32
  }
}

module attributes {stable_mosaic.version = 11 : i64} {
  func.func @_latent_dist_kernel(%arg0: i32, %arg1: memref<8x32xf32, #tpu.memory_space<vmem>>, %arg2: memref<32x32xf32, #tpu.memory_space<vmem>>, %arg3: memref<1x32xf32, #tpu.memory_space<vmem>>, %arg4: memref<8x16xf32, #tpu.memory_space<vmem>>, %arg5: memref<8x16xf32, #tpu.memory_space<vmem>>) attributes {dimension_semantics = [#tpu.dimension_semantics<parallel>], iteration_bounds = array<i64: 1>, scalar_prefetch = 0 : i64, scratch_operands = 0 : i64, tpu.core_type = #tpu.core_type<tc>, window_params = [{transform_indices = @transform_0, window_bounds = array<i64: 8, 32>}, {pipeline_mode = #tpu.pipeline_mode<synchronous>, transform_indices = @transform_1, window_bounds = array<i64: 32, 32>}, {pipeline_mode = #tpu.pipeline_mode<synchronous>, transform_indices = @transform_2, window_bounds = array<i64: 1, 32>}, {transform_indices = @transform_3, window_bounds = array<i64: 8, 16>}, {transform_indices = @transform_4, window_bounds = array<i64: 8, 16>}]} {
    %c0 = arith.constant 0 : index
    %c0_0 = arith.constant 0 : index
    %0 = vector.load %arg1[%c0, %c0_0] : memref<8x32xf32, #tpu.memory_space<vmem>>, vector<8x32xf32>
    %c0_1 = arith.constant 0 : index
    %c0_2 = arith.constant 0 : index
    %1 = vector.load %arg2[%c0_1, %c0_2] : memref<32x32xf32, #tpu.memory_space<vmem>>, vector<32x32xf32>
    %cst = arith.constant dense<0.000000e+00> : vector<8x32xf32>
    %2 = tpu.matmul %0, %1, %cst {dimension_numbers = #tpu.dot_dimension_numbers<[1], [0], [0], [1], [0, 0, 1, 1], [], []>} : vector<8x32xf32>, vector<32x32xf32>, vector<8x32xf32> -> vector<8x32xf32>
    %c0_3 = arith.constant 0 : index
    %c0_4 = arith.constant 0 : index
    %3 = vector.load %arg3[%c0_3, %c0_4] : memref<1x32xf32, #tpu.memory_space<vmem>>, vector<1x32xf32>
    %4 = vector.broadcast %3 : vector<1x32xf32> to vector<8x32xf32>
    %5 = arith.addf %2, %4 : vector<8x32xf32>
    %6 = vector.extract_strided_slice %5 {offsets = [0, 0], sizes = [8, 16], strides = [1, 1]} : vector<8x32xf32> to vector<8x16xf32>
    %c0_5 = arith.constant 0 : index
    %c0_6 = arith.constant 0 : index
    %7 = vector.load %arg4[%c0_5, %c0_6] : memref<8x16xf32, #tpu.memory_space<vmem>>, vector<8x16xf32>
    tpu.vector_store %arg4[%c0_5, %c0_6], %6 {strides = array<i32>} : memref<8x16xf32, #tpu.memory_space<vmem>>, vector<8x16xf32>,
    %8 = vector.extract_strided_slice %5 {offsets = [0, 16], sizes = [8, 16], strides = [1, 1]} : vector<8x32xf32> to vector<8x16xf32>
    %cst_7 = arith.constant 5.000000e-01 : f32
    %9 = vector.broadcast %cst_7 : f32 to vector<8x16xf32>
    %10 = arith.mulf %8, %9 : vector<8x16xf32>
    %11 = math.exp %10 : vector<8x16xf32>
    %c0_8 = arith.constant 0 : index
    %c0_9 = arith.constant 0 : index
    %12 = vector.load %arg5[%c0_8, %c0_9] : memref<8x16xf32, #tpu.memory_space<vmem>>, vector<8x16xf32>
    tpu.vector_store %arg5[%c0_8, %c0_9], %11 {strides = array<i32>} : memref<8x16xf32, #tpu.memory_space<vmem>>, vector<8x16xf32>,
    return
  }
  func.func @transform_0(%arg0: i32) -> (i32, i32) {
    %c0_i32 = arith.constant 0 : i32
    %c0_i32_0 = arith.constant 0 : i32
    return %arg0, %c0_i32 : i32, i32
  }
  func.func @transform_1(%arg0: i32) -> (i32, i32) {
    %c0_i32 = arith.constant 0 : i32
    %c0_i32_0 = arith.constant 0 : i32
    %c0_i32_1 = arith.constant 0 : i32
    return %c0_i32, %c0_i32_0 : i32, i32
  }
  func.func @transform_2(%arg0: i32) -> (i32, i32) {
    %c0_i32 = arith.constant 0 : i32
    %c0_i32_0 = arith.constant 0 : i32
    %c0_i32_1 = arith.constant 0 : i32
    return %c0_i32, %c0_i32_0 : i32, i32
  }
  func.func @transform_3(%arg0: i32) -> (i32, i32) {
    %c0_i32 = arith.constant 0 : i32
    %c0_i32_0 = arith.constant 0 : i32
    return %arg0, %c0_i32 : i32, i32
  }
  func.func @transform_4(%arg0: i32) -> (i32, i32) {
    %c0_i32 = arith.constant 0 : i32
    %c0_i32_0 = arith.constant 0 : i32
    return %arg0, %c0_i32 : i32, i32
  }
}

</mosaic_0001>

<llo_original>
// kernel: tpu_custom_call.1
$region0: #{tpu_custom_call.1}
  #allocation0 [shape = 'u32[]', space=smem, size = 0x4, offset = 0x4, fixed_abs, tag = 'smem constant byte address 0x4 - core index']
  #allocation1 [shape = 'u32[144,128]{1,0:T(1,128)}', space=vmem, size = 0x12000, scoped, tag = 'internal scratch']
  %s0 = inlined_call_operand.hbm [shape: f32[8,32], index: 0, kind: input, shape index: {}]
  %s1 = inlined_call_operand.hbm [shape: f32[32,32], index: 1, kind: input, shape index: {}]
  %s2 = inlined_call_operand.vmem [shape: f32[1,32], index: 2, kind: input, shape index: {}]
  %s3 = inlined_call_operand.hbm [shape: f32[8,16], index: 3, kind: output, shape index: {0}]
  %s4 = inlined_call_operand.hbm [shape: f32[8,16], index: 4, kind: output, shape index: {1}]
  %5 = xla_tuple %s3, %s4
  %s6 = sld [smem:[#allocation0]]
  $region38: #{tpu_custom_call.1} parent=0
    _
  %s8 = ssub.s32 1, %s6
  %s9 = scalar_select 0, %s8, %s6
  $region1: #{tpu_custom_call.1} parent=0
    #allocation2 [shape = 'u8[4096]{0}', space=vmem, size = 0x1000, scoped, tag = 'input window, operand 0, single buffered']
    #allocation3 [shape = 's32[1]{0}', space=sflag, size = 0x4, scoped, tag = 'scoped memory for tpu_custom_call.1']
    #allocation4 [shape = 's32[1]{0}', space=sflag, size = 0x4, scoped, tag = 'scoped memory for tpu_custom_call.1']
    #allocation5 [shape = 'u8[16384]{0}', space=vmem, size = 0x4000, scoped, tag = 'input window, operand 1, single buffered']
    #allocation6 [shape = 's32[1]{0}', space=sflag, size = 0x4, scoped, tag = 'scoped memory for tpu_custom_call.1']
    #allocation7 [shape = 'u8[4096]{0}', space=vmem, size = 0x1000, scoped, tag = 'output window, operand 0, single buffered']
    #allocation8 [shape = 'u8[4096]{0}', space=vmem, size = 0x1000, scoped, tag = 'output window, operand 1, single buffered']
    #allocation9 [shape = 's32[1]{0}', space=sflag, size = 0x4, scoped, tag = 'scoped memory for tpu_custom_call.1']
    %10 = vsyncpa [#allocation3], 0
    %11 = vsyncpa [#allocation6], 0
    %12 = vsyncpa [#allocation4], 0
    %13 = vsyncpa [#allocation9], 0
    // Predicated region
    $region2: #{tpu_custom_call.1} parent=1 // pred_check
      _
    $region3: #{tpu_custom_call.1} parent=1 // pred_check_branch
      %15 = sbr.rel (0) target = $region5
    $region4: #{tpu_custom_call.1} parent=1 // pred_region
      %s17 = ssub.s32 128, 128
      %18 = vsyncadd [#allocation3], %s17
      %s20 = sshll.u32 [#allocation2], 4
      %s21 = int_to_ptr.vmem [resolvable:$true] %s20
      %23 = dma.hbm_to_vmem [thread:$0]  %s0, 128, %s21, [#allocation3]
    $region5: #{tpu_custom_call.1} parent=1 // pred_fallthru
      _
    // Predicated region
    $region6: #{tpu_custom_call.1} parent=1 // pred_check
      _
    $region7: #{tpu_custom_call.1} parent=1 // pred_check_branch
      %25 = sbr.rel (0) target = $region9
    $region8: #{tpu_custom_call.1} parent=1 // pred_region
      %s27 = ssub.s32 512, 512
      %28 = vsyncadd [#allocation6], %s27
      %s29 = sshll.u32 [#allocation5], 4
      %s30 = int_to_ptr.vmem [resolvable:$true] %s29
      %35 = dma.hbm_to_vmem [thread:$0]  %s1, 512, %s30, [#allocation6], 128, 128, 8
    $region9: #{tpu_custom_call.1} parent=1 // pred_fallthru
      _
    // Predicated region
    $region10: #{tpu_custom_call.1} parent=1 // pred_check
      _
    $region11: #{tpu_custom_call.1} parent=1 // pred_check_branch
      %37 = sbr.rel (0) target = $region13
    $region12: #{tpu_custom_call.1} parent=1 // pred_region
      _
    $region13: #{tpu_custom_call.1} parent=1 // pred_fallthru
      _
    // Predicated region
    $region14: #{tpu_custom_call.1} parent=1 // pred_check
      _
    $region15: #{tpu_custom_call.1} parent=1 // pred_check_branch
      %39 = sbr.rel (0) target = $region17
    $region16: #{tpu_custom_call.1} parent=1 // pred_region
      %40 = dma.done [#allocation3], 128
    $region17: #{tpu_custom_call.1} parent=1 // pred_fallthru
      _
    // Predicated region
    $region18: #{tpu_custom_call.1} parent=1 // pred_check
      _
    $region19: #{tpu_custom_call.1} parent=1 // pred_check_branch
      %42 = sbr.rel (0) target = $region21
    $region20: #{tpu_custom_call.1} parent=1 // pred_region
      %43 = dma.done [#allocation6], 512
    $region21: #{tpu_custom_call.1} parent=1 // pred_fallthru
      _
    %v44 = vld [vmem:[#allocation2] sm:$0xff]
    %v45 = vld [vmem:[#allocation5] sm:$0xff]
    %v46 = vld [vmem:[#allocation5 + $0x8] sm:$0xff]
    %v47 = vld [vmem:[#allocation5 + $0x10] sm:$0xff]
    %v48 = vld [vmem:[#allocation5 + $0x18] sm:$0xff]
    %v49 = vld [vmem:[%s2] sm:$0x1]
    %v51 = vlaneseq
    %v52 = vshrl.u32 %v51, 7
    %v53 = vsub.s32 0, %v52
    %v54 = vrot.slane %v49, %v53
    %vm56 = vcmask 261120
    %v58 = vsel %vm56, %v44, 0
    %60 = vmatprep.subr.mxu0 0.0
    %61 = vmatpush1.msra.mxu0 %v45
    %62 = vmatprep.subr.mxu0 0.0
    %63 = vmatpush1.msra.mxu0 %v46
    %64 = vmatprep.subr.mxu0 0.0
    %65 = vmatpush1.msra.mxu0 %v47
    %66 = vmatprep.subr.mxu0 0.0
    %67 = vmatpush1.msra.mxu0 %v48
    %68 = vmatprep.subr.mxu0 0.0
    %69 = vmatpush1.msra.mxu0 0.0
    %70 = vmatprep.subr.mxu0 0.0
    %71 = vmatpush1.msra.mxu0 0.0
    %72 = vmatprep.subr.mxu0 0.0
    %73 = vmatpush1.msra.mxu0 0.0
    %74 = vmatprep.subr.mxu0 0.0
    %75 = vmatpush1.msra.mxu0 0.0
    %76 = vmatprep.subr.mxu0 0.0
    %77 = vmatpush1.msra.mxu0 0.0
    %78 = vmatprep.subr.mxu0 0.0
    %79 = vmatpush1.msra.mxu0 0.0
    %80 = vmatprep.subr.mxu0 0.0
    %81 = vmatpush1.msra.mxu0 0.0
    %82 = vmatprep.subr.mxu0 0.0
    %83 = vmatpush1.msra.mxu0 0.0
    %84 = vmatprep.subr.mxu0 0.0
    %85 = vmatpush1.msra.mxu0 0.0
    %86 = vmatprep.subr.mxu0 0.0
    %87 = vmatpush1.msra.mxu0 0.0
    %88 = vmatprep.subr.mxu0 0.0
    %89 = vmatpush1.msra.mxu0 0.0
    %90 = vmatprep.subr.mxu0 0.0
    %91 = vmatpush1.msra.mxu0 0.0
    %92 = vmatprep.subr.mxu0 0.0
    %93 = vmatpush1.msra.mxu0 0.0
    %94 = vmatprep.subr.mxu0 0.0
    %95 = vmatpush1.msra.mxu0 0.0
    %96 = vmatprep.subr.mxu0 0.0
    %97 = vmatpush1.msra.mxu0 0.0
    %98 = vmatprep.subr.mxu0 0.0
    %99 = vmatpush1.msra.mxu0 0.0
    %100 = vmatprep.subr.mxu0 0.0
    %101 = vmatpush1.msra.mxu0 0.0
    %102 = vmatprep.subr.mxu0 0.0
    %103 = vmatpush1.msra.mxu0 0.0
    %104 = vmatprep.subr.mxu0 0.0
    %105 = vmatpush1.msra.mxu0 0.0
    %106 = vmatprep.subr.mxu0 0.0
    %107 = vmatpush1.msra.mxu0 0.0
    %108 = vmatprep.subr.mxu0 0.0
    %109 = vmatpush1.msra.mxu0 0.0
    %110 = vmatprep.subr.mxu0 0.0
    %111 = vmatpush1.msra.mxu0 0.0
    %112 = vmatprep.subr.mxu0 0.0
    %113 = vmatpush1.msra.mxu0 0.0
    %114 = vmatprep.subr.mxu0 0.0
    %115 = vmatpush1.msra.mxu0 0.0
    %116 = vmatprep.subr.mxu0 0.0
    %117 = vmatpush1.msra.mxu0 0.0
    %118 = vmatprep.subr.mxu0 0.0
    %119 = vmatpush1.msra.mxu0 0.0
    %120 = vmatprep.subr.mxu0 0.0
    %121 = vmatpush1.msra.mxu0 0.0
    %122 = vmatprep.subr.mxu0 0.0
    %123 = vmatpush1.msra.mxu0 0.0
    %124 = vmatprep.mubr.f32.mxu0 0.0
    %125 = vmatmul.mubr.f32.gmra.mrb[0].mxu0 %v58
    %v126 = vpop.f32.mrb[0].mxu0
    %v127 = vadd.f32 %v54, %v126
    %v128 = vpop.f32.mrb[0].mxu0
    %129 = vdwg.mxu0
    %vm130 = vcmask 130048
    %131 = vst.msk [vmem:[#allocation7] sm:$0xff] %vm130, %v127
    %v132 = vmul.f32 %v127, 0.5
    %v133 = vmul.f32 %v132, 1.442695
    %v134 = vpow.pop %v133
    %136 = vrot.lane.b32.xlu0 %v134, 112
    %v137 = vpop.permute.xlu0 %136
    %139 = vst.msk [vmem:[#allocation8] sm:$0xff] %vm130, %v137
    // Predicated region
    $region22: #{tpu_custom_call.1} parent=1 // pred_check
      _
    $region23: #{tpu_custom_call.1} parent=1 // pred_check_branch
      %141 = sbr.rel (0) target = $region25
    $region24: #{tpu_custom_call.1} parent=1 // pred_region
      %s143 = ssub.s32 128, 128
      %144 = vsyncadd [#allocation4], %s143
      %s146 = sshll.u32 [#allocation7], 4
      %s147 = int_to_ptr.vmem [resolvable:$true] %s146
      %149 = dma.vmem_to_hbm [thread:$0]  %s147, 128, %s3, [#allocation4]
    $region25: #{tpu_custom_call.1} parent=1 // pred_fallthru
      _
    // Predicated region
    $region26: #{tpu_custom_call.1} parent=1 // pred_check
      _
    $region27: #{tpu_custom_call.1} parent=1 // pred_check_branch
      %151 = sbr.rel (0) target = $region29
    $region28: #{tpu_custom_call.1} parent=1 // pred_region
      %s153 = ssub.s32 128, 128
      %154 = vsyncadd [#allocation9], %s153
      %s156 = sshll.u32 [#allocation8], 4
      %s157 = int_to_ptr.vmem [resolvable:$true] %s156
      %159 = dma.vmem_to_hbm [thread:$0]  %s157, 128, %s4, [#allocation9]
    $region29: #{tpu_custom_call.1} parent=1 // pred_fallthru
      _
    // Predicated region
    $region30: #{tpu_custom_call.1} parent=1 // pred_check
      _
    $region31: #{tpu_custom_call.1} parent=1 // pred_check_branch
      %161 = sbr.rel (0) target = $region33
    $region32: #{tpu_custom_call.1} parent=1 // pred_region
      %162 = dma.done [#allocation4], 128
    $region33: #{tpu_custom_call.1} parent=1 // pred_fallthru
      _
    // Predicated region
    $region34: #{tpu_custom_call.1} parent=1 // pred_check
      _
    $region35: #{tpu_custom_call.1} parent=1 // pred_check_branch
      %164 = sbr.rel (0) target = $region37
    $region36: #{tpu_custom_call.1} parent=1 // pred_region
      %165 = dma.done [#allocation9], 128
    $region37: #{tpu_custom_call.1} parent=1 // pred_fallthru
      _
    %166 = vsyncpa [#allocation3], 1
    %167 = vsyncpa [#allocation6], 1
    %168 = vsyncpa [#allocation4], 1
    %169 = vsyncpa [#allocation9], 1

// kernel: tpu_custom_call.1
$region0: #{tpu_custom_call.1}
  #allocation0 [shape = 'u32[]', space=smem, size = 0x4, offset = 0x4, fixed_abs, tag = 'smem constant byte address 0x4 - core index']
  #allocation1 [shape = 'u32[144,128]{1,0:T(1,128)}', space=vmem, size = 0x12000, scoped, tag = 'internal scratch']
  %s0 = inlined_call_operand.hbm [shape: f32[8,32], index: 0, kind: input, shape index: {}]
  %s1 = inlined_call_operand.hbm [shape: f32[32,32], index: 1, kind: input, shape index: {}]
  %s2 = inlined_call_operand.vmem [shape: f32[1,32], index: 2, kind: input, shape index: {}]
  %s3 = inlined_call_operand.hbm [shape: f32[8,16], index: 3, kind: output, shape index: {0}]
  %s4 = inlined_call_operand.hbm [shape: f32[8,16], index: 4, kind: output, shape index: {1}]
  %5 = xla_tuple %s3, %s4
  %s6 = sld [smem:[#allocation0]]
  $region38: #{tpu_custom_call.1} parent=0
    _
  %s8 = ssub.s32 1, %s6
  %s9 = scalar_select 0, %s8, %s6
  $region1: #{tpu_custom_call.1} parent=0
    #allocation2 [shape = 'u8[4096]{0}', space=vmem, size = 0x1000, scoped, tag = 'input window, operand 0, single buffered']
    #allocation3 [shape = 's32[1]{0}', space=sflag, size = 0x4, scoped, tag = 'scoped memory for tpu_custom_call.1']
    #allocation4 [shape = 's32[1]{0}', space=sflag, size = 0x4, scoped, tag = 'scoped memory for tpu_custom_call.1']
    #allocation5 [shape = 'u8[16384]{0}', space=vmem, size = 0x4000, scoped, tag = 'input window, operand 1, single buffered']
    #allocation6 [shape = 's32[1]{0}', space=sflag, size = 0x4, scoped, tag = 'scoped memory for tpu_custom_call.1']
    #allocation7 [shape = 'u8[4096]{0}', space=vmem, size = 0x1000, scoped, tag = 'output window, operand 0, single buffered']
    #allocation8 [shape = 'u8[4096]{0}', space=vmem, size = 0x1000, scoped, tag = 'output window, operand 1, single buffered']
    #allocation9 [shape = 's32[1]{0}', space=sflag, size = 0x4, scoped, tag = 'scoped memory for tpu_custom_call.1']
    %10 = vsyncpa [#allocation3], 0
    %11 = vsyncpa [#allocation6], 0
    %12 = vsyncpa [#allocation4], 0
    %13 = vsyncpa [#allocation9], 0
    // Predicated region
    $region2: #{tpu_custom_call.1} parent=1 // pred_check
      _
    $region3: #{tpu_custom_call.1} parent=1 // pred_check_branch
      %15 = sbr.rel (0) target = $region5
    $region4: #{tpu_custom_call.1} parent=1 // pred_region
      %s17 = ssub.s32 128, 128
      %18 = vsyncadd [#allocation3], %s17
      %s20 = sshll.u32 [#allocation2], 4
      %s21 = int_to_ptr.vmem [resolvable:$true] %s20
      %23 = dma.hbm_to_vmem [thread:$0]  %s0, 128, %s21, [#allocation3]
    $region5: #{tpu_custom_call.1} parent=1 // pred_fallthru
      _
    // Predicated region
    $region6: #{tpu_custom_call.1} parent=1 // pred_check
      _
    $region7: #{tpu_custom_call.1} parent=1 // pred_check_branch
      %25 = sbr.rel (0) target = $region9
    $region8: #{tpu_custom_call.1} parent=1 // pred_region
      %s27 = ssub.s32 512, 512
      %28 = vsyncadd [#allocation6], %s27
      %s29 = sshll.u32 [#allocation5], 4
      %s30 = int_to_ptr.vmem [resolvable:$true] %s29
      %35 = dma.hbm_to_vmem [thread:$0]  %s1, 512, %s30, [#allocation6], 128, 128, 8
    $region9: #{tpu_custom_call.1} parent=1 // pred_fallthru
      _
    // Predicated region
    $region10: #{tpu_custom_call.1} parent=1 // pred_check
      _
    $region11: #{tpu_custom_call.1} parent=1 // pred_check_branch
      %37 = sbr.rel (0) target = $region13
    $region12: #{tpu_custom_call.1} parent=1 // pred_region
      _
    $region13: #{tpu_custom_call.1} parent=1 // pred_fallthru
      _
    // Predicated region
    $region14: #{tpu_custom_call.1} parent=1 // pred_check
      _
    $region15: #{tpu_custom_call.1} parent=1 // pred_check_branch
      %39 = sbr.rel (0) target = $region17
    $region16: #{tpu_custom_call.1} parent=1 // pred_region
      %40 = dma.done [#allocation3], 128
    $region17: #{tpu_custom_call.1} parent=1 // pred_fallthru
      _
    // Predicated region
    $region18: #{tpu_custom_call.1} parent=1 // pred_check
      _
    $region19: #{tpu_custom_call.1} parent=1 // pred_check_branch
      %42 = sbr.rel (0) target = $region21
    $region20: #{tpu_custom_call.1} parent=1 // pred_region
      %43 = dma.done [#allocation6], 512
    $region21: #{tpu_custom_call.1} parent=1 // pred_fallthru
      _
    %v44 = vld [vmem:[#allocation2] sm:$0xff]
    %v45 = vld [vmem:[#allocation5] sm:$0xff]
    %v46 = vld [vmem:[#allocation5 + $0x8] sm:$0xff]
    %v47 = vld [vmem:[#allocation5 + $0x10] sm:$0xff]
    %v48 = vld [vmem:[#allocation5 + $0x18] sm:$0xff]
    %v49 = vld [vmem:[%s2] sm:$0x1]
    %v51 = vlaneseq
    %v52 = vshrl.u32 %v51, 7
    %v53 = vsub.s32 0, %v52
    %v54 = vrot.slane %v49, %v53
    %vm56 = vcmask 261120
    %v58 = vsel %vm56, %v44, 0
    %60 = vmatprep.subr.mxu0 0.0
    %61 = vmatpush1.msra.mxu0 %v45
    %62 = vmatprep.subr.mxu0 0.0
    %63 = vmatpush1.msra.mxu0 %v46
    %64 = vmatprep.subr.mxu0 0.0
    %65 = vmatpush1.msra.mxu0 %v47
    %66 = vmatprep.subr.mxu0 0.0
    %67 = vmatpush1.msra.mxu0 %v48
    %68 = vmatprep.subr.mxu0 0.0
    %69 = vmatpush1.msra.mxu0 0.0
    %70 = vmatprep.subr.mxu0 0.0
    %71 = vmatpush1.msra.mxu0 0.0
    %72 = vmatprep.subr.mxu0 0.0
    %73 = vmatpush1.msra.mxu0 0.0
    %74 = vmatprep.subr.mxu0 0.0
    %75 = vmatpush1.msra.mxu0 0.0
    %76 = vmatprep.subr.mxu0 0.0
    %77 = vmatpush1.msra.mxu0 0.0
    %78 = vmatprep.subr.mxu0 0.0
    %79 = vmatpush1.msra.mxu0 0.0
    %80 = vmatprep.subr.mxu0 0.0
    %81 = vmatpush1.msra.mxu0 0.0
    %82 = vmatprep.subr.mxu0 0.0
    %83 = vmatpush1.msra.mxu0 0.0
    %84 = vmatprep.subr.mxu0 0.0
    %85 = vmatpush1.msra.mxu0 0.0
    %86 = vmatprep.subr.mxu0 0.0
    %87 = vmatpush1.msra.mxu0 0.0
    %88 = vmatprep.subr.mxu0 0.0
    %89 = vmatpush1.msra.mxu0 0.0
    %90 = vmatprep.subr.mxu0 0.0
    %91 = vmatpush1.msra.mxu0 0.0
    %92 = vmatprep.subr.mxu0 0.0
    %93 = vmatpush1.msra.mxu0 0.0
    %94 = vmatprep.subr.mxu0 0.0
    %95 = vmatpush1.msra.mxu0 0.0
    %96 = vmatprep.subr.mxu0 0.0
    %97 = vmatpush1.msra.mxu0 0.0
    %98 = vmatprep.subr.mxu0 0.0
    %99 = vmatpush1.msra.mxu0 0.0
    %100 = vmatprep.subr.mxu0 0.0
    %101 = vmatpush1.msra.mxu0 0.0
    %102 = vmatprep.subr.mxu0 0.0
    %103 = vmatpush1.msra.mxu0 0.0
    %104 = vmatprep.subr.mxu0 0.0
    %105 = vmatpush1.msra.mxu0 0.0
    %106 = vmatprep.subr.mxu0 0.0
    %107 = vmatpush1.msra.mxu0 0.0
    %108 = vmatprep.subr.mxu0 0.0
    %109 = vmatpush1.msra.mxu0 0.0
    %110 = vmatprep.subr.mxu0 0.0
    %111 = vmatpush1.msra.mxu0 0.0
    %112 = vmatprep.subr.mxu0 0.0
    %113 = vmatpush1.msra.mxu0 0.0
    %114 = vmatprep.subr.mxu0 0.0
    %115 = vmatpush1.msra.mxu0 0.0
    %116 = vmatprep.subr.mxu0 0.0
    %117 = vmatpush1.msra.mxu0 0.0
    %118 = vmatprep.subr.mxu0 0.0
    %119 = vmatpush1.msra.mxu0 0.0
    %120 = vmatprep.subr.mxu0 0.0
    %121 = vmatpush1.msra.mxu0 0.0
    %122 = vmatprep.subr.mxu0 0.0
    %123 = vmatpush1.msra.mxu0 0.0
    %124 = vmatprep.mubr.f32.mxu0 0.0
    %125 = vmatmul.mubr.f32.gmra.mrb[0].mxu0 %v58
    %v126 = vpop.f32.mrb[0].mxu0
    %v127 = vadd.f32 %v54, %v126
    %v128 = vpop.f32.mrb[0].mxu0
    %129 = vdwg.mxu0
    %vm130 = vcmask 130048
    %131 = vst.msk [vmem:[#allocation7] sm:$0xff] %vm130, %v127
    %v132 = vmul.f32 %v127, 0.5
    %v133 = vmul.f32 %v132, 1.442695
    %v134 = vpow.pop %v133
    %136 = vrot.lane.b32.xlu0 %v134, 112
    %v137 = vpop.permute.xlu0 %136
    %139 = vst.msk [vmem:[#allocation8] sm:$0xff] %vm130, %v137
    // Predicated region
    $region22: #{tpu_custom_call.1} parent=1 // pred_check
      _
    $region23: #{tpu_custom_call.1} parent=1 // pred_check_branch
      %141 = sbr.rel (0) target = $region25
    $region24: #{tpu_custom_call.1} parent=1 // pred_region
      %s143 = ssub.s32 128, 128
      %144 = vsyncadd [#allocation4], %s143
      %s146 = sshll.u32 [#allocation7], 4
      %s147 = int_to_ptr.vmem [resolvable:$true] %s146
      %149 = dma.vmem_to_hbm [thread:$0]  %s147, 128, %s3, [#allocation4]
    $region25: #{tpu_custom_call.1} parent=1 // pred_fallthru
      _
    // Predicated region
    $region26: #{tpu_custom_call.1} parent=1 // pred_check
      _
    $region27: #{tpu_custom_call.1} parent=1 // pred_check_branch
      %151 = sbr.rel (0) target = $region29
    $region28: #{tpu_custom_call.1} parent=1 // pred_region
      %s153 = ssub.s32 128, 128
      %154 = vsyncadd [#allocation9], %s153
      %s156 = sshll.u32 [#allocation8], 4
      %s157 = int_to_ptr.vmem [resolvable:$true] %s156
      %159 = dma.vmem_to_hbm [thread:$0]  %s157, 128, %s4, [#allocation9]
    $region29: #{tpu_custom_call.1} parent=1 // pred_fallthru
      _
    // Predicated region
    $region30: #{tpu_custom_call.1} parent=1 // pred_check
      _
    $region31: #{tpu_custom_call.1} parent=1 // pred_check_branch
      %161 = sbr.rel (0) target = $region33
    $region32: #{tpu_custom_call.1} parent=1 // pred_region
      %162 = dma.done [#allocation4], 128
    $region33: #{tpu_custom_call.1} parent=1 // pred_fallthru
      _
    // Predicated region
    $region34: #{tpu_custom_call.1} parent=1 // pred_check
      _
    $region35: #{tpu_custom_call.1} parent=1 // pred_check_branch
      %164 = sbr.rel (0) target = $region37
    $region36: #{tpu_custom_call.1} parent=1 // pred_region
      %165 = dma.done [#allocation9], 128
    $region37: #{tpu_custom_call.1} parent=1 // pred_fallthru
      _
    %166 = vsyncpa [#allocation3], 1
    %167 = vsyncpa [#allocation6], 1
    %168 = vsyncpa [#allocation4], 1
    %169 = vsyncpa [#allocation9], 1

</llo_original>
